<compile_context>
chip_gen: v7x
topology: tpu7x:2x2x1
jax: 0.10.0
libtpu: 0.0.40
codegen_flags: <defaults>
</compile_context>

<pallas_src>
import functools
import math

import jax
import jax.numpy as jnp
import numpy as np
from jax import lax
from jax.experimental import pallas as pl
from jax.experimental.pallas import tpu as pltpu

_TWO_PI = 2.0 * math.pi


# ----------------------------------------------------------------------------
# Pallas kernel: one (TH, TL) output tile of K = Re(sum_n cj[h,n] * P[n,h,l])
# ----------------------------------------------------------------------------
def _s4d_block_kernel(cjr_ref, cji_ref, pr_ref, pi_ref, out_ref, *, tc):
    # cjr/cji : (TH, N2)      2 * C' * z^(j*TL)  (block offset + 2x folded in)
    # pr/pi   : (N2, TH, TL)  real/imag of exp(dtA * l_local), l_local = 0..TL-1
    # out     : (TH, TL)      real convolution kernel tile
    n2 = pr_ref.shape[0]
    th, tl = out_ref.shape

    # Small (TH, N2) coefficient blocks are loaded once and kept in vregs.
    cjr = cjr_ref[...]
    cji = cji_ref[...]

    for c in range(tl // tc):                       # static lane-chunk loop
        lo = c * tc
        acc = jnp.zeros((th, tc), jnp.float32)      # <= 8 vregs
        for n in range(n2):                         # static, fully unrolled
            # (TH, 1) per-row coefficient broadcast across the lane chunk.
            # TODO(synk): if the bundle shows the per-(n,chunk) lane-broadcast
            # on the binding slot, pre-splat cj into a (N2,TH,128) VMEM scratch.
            acc = (acc
                   + cjr[:, n:n + 1] * pr_ref[n, :, lo:lo + tc]
                   - cji[:, n:n + 1] * pi_ref[n, :, lo:lo + tc])
        out_ref[:, lo:lo + tc] = acc


# ----------------------------------------------------------------------------
# Tiling helpers
# ----------------------------------------------------------------------------
def _device_kind():
    try:
        return jax.devices()[0].device_kind.lower()
    except Exception:
        return ""


def _vmem_need(th, tl, n2):
    p_bytes = 2 * 2 * n2 * th * tl * 4       # 2 seed tables, double-buffered
    cj_bytes = 2 * 2 * th * 128 * 4          # cj r/i blocks (lane-padded), 2 bufs
    out_bytes = 2 * th * tl * 4              # double-buffered output tile
    return p_bytes + cj_bytes + out_bytes


def _pick_tc(th, tl):
    # Largest lane chunk (multiple of 128 dividing TL) keeping acc <= 8 vregs.
    for tc in (tl, 512, 256, 128):
        if tc <= tl and tl % tc == 0 and th * tc <= 8 * 1024:
            return tc
    return 128


# ----------------------------------------------------------------------------
# S4DKernel.forward: parameter prep (glue) + Pallas hot path
# ----------------------------------------------------------------------------
@functools.partial(jax.jit, static_argnames=("L",))
def s4d_kernel_forward(log_dt, C_real, C_imag, log_A_real, A_imag, *, L):
    """Returns the S4D convolution kernel K of shape (H, L), float32."""
    H, N2 = log_A_real.shape

    # ---- small per-(h, n) parameter preprocessing (plain JAX, one-time) ----
    dt = jnp.exp(log_dt).astype(jnp.float32)                  # (H,)
    Ar = -jnp.exp(log_A_real).astype(jnp.float32)             # (H, N2)
    Ai = A_imag.astype(jnp.float32)
    dtAr = Ar * dt[:, None]                                    # Re(dtA)
    dtAi = Ai * dt[:, None]                                    # Im(dtA)

    # C' = 2 * C * (exp(dtA) - 1) / A  (2x output scale folded in here)
    ex = jnp.exp(dtAr)
    num_r = ex * jnp.cos(dtAi) - 1.0
    num_i = ex * jnp.sin(dtAi)
    den = Ar * Ar + Ai * Ai
    q_r = (num_r * Ar + num_i * Ai) / den
    q_i = (num_i * Ar - num_r * Ai) / den
    Cr = C_real.astype(jnp.float32)
    Ci = C_imag.astype(jnp.float32)
    cp_r = 2.0 * (Cr * q_r - Ci * q_i)
    cp_i = 2.0 * (Cr * q_i + Ci * q_r)

    # ---- tile selection (chip-aware, VMEM-budgeted) ----
    kind = _device_kind()
    is_v7 = "v7" in kind
    # L tile: big on v7x (compute-bound, 3.2 TB/s HBM); 256 on v5e/v6e to keep
    # the dominant P-table HBM stream (prop. to TL) small.
    tl_target = 512 if is_v7 else 256
    TL = min(tl_target, pl.cdiv(L, 128) * 128)
    L_pad = pl.cdiv(L, TL) * TL
    NJ = L_pad // TL

    H_pad = pl.cdiv(H, 8) * 8
    vmem_budget = (48 if is_v7 else 96) * 1024 * 1024
    TH = 8
    for cand in (64, 32, 16, 8):                 # TH<=64 keeps vreg pressure safe
        if H_pad % cand:
            continue
        if _vmem_need(cand, TL, N2) <= vmem_budget:
            TH = cand
            break
    # Keep >= 2 H tiles when possible so v7x's two TensorCores both get work.
    if is_v7 and H_pad // TH == 1 and TH > 8 and H_pad % (TH // 2) == 0:
        TH //= 2
    TC = _pick_tc(TH, TL)

    pad_h = ((0, H_pad - H), (0, 0))
    cp_r, cp_i = jnp.pad(cp_r, pad_h), jnp.pad(cp_i, pad_h)
    dtAr, dtAi = jnp.pad(dtAr, pad_h), jnp.pad(dtAi, pad_h)

    # Seed table P[n, h, l] = exp(dtA[h,n] * l), l = 0..TL-1, built directly in
    # the kernel layout (N2, H_pad, TL) -> no big transpose / extra HBM copy.
    lvec = jnp.arange(TL, dtype=jnp.float32)
    dtAr_t, dtAi_t = dtAr.T, dtAi.T                            # tiny (N2, H_pad)
    mag = jnp.exp(dtAr_t[:, :, None] * lvec)                   # (N2, H_pad, TL)
    ph = dtAi_t[:, :, None] * lvec
    P_r = mag * jnp.cos(ph)
    P_i = mag * jnp.sin(ph)

    # Per-L-tile offsets z^(j*TL) folded into C' (exact mod-2*pi transcendental
    # re-seed every TL lanes), built directly as lane-dense (NJ, H_pad, N2).
    jvec = jnp.arange(NJ, dtype=jnp.float32)[:, None, None]    # (NJ, 1, 1)
    rho = dtAr * TL                                            # (H_pad, N2)
    phi = jnp.mod(dtAi * TL, _TWO_PI)                          # range-reduced step
    theta = jnp.mod(phi[None, :, :] * jvec, _TWO_PI)           # (NJ, H_pad, N2)
    bmag = jnp.exp(rho[None, :, :] * jvec)
    b_r = bmag * jnp.cos(theta)
    b_i = bmag * jnp.sin(theta)
    cj_r = cp_r[None] * b_r - cp_i[None] * b_i                 # (NJ, H_pad, N2)
    cj_i = cp_r[None] * b_i + cp_i[None] * b_r

    # ---- Pallas call.  L innermost so the j-independent P block is DMA'd
    # only once per H tile (re-ordering the grid would multiply P traffic). ----
    grid = (H_pad // TH, L_pad // TL)
    cj_spec = pl.BlockSpec((None, TH, N2), lambda i, j: (j, i, 0))
    p_spec = pl.BlockSpec((N2, TH, TL), lambda i, j: (0, i, 0))
    out_spec = pl.BlockSpec((TH, TL), lambda i, j: (i, j))

    kern = functools.partial(_s4d_block_kernel, tc=TC)

    need = _vmem_need(TH, TL, N2)
    vmem_limit = int(min(need + (8 << 20), (56 << 20) if is_v7 else (100 << 20)))
    flops = 4 * H_pad * N2 * L_pad
    bytes_accessed = 4 * (2 * N2 * H_pad * TL + 2 * NJ * H_pad * N2
                          + H_pad * L_pad)

    K_pad = pl.pallas_call(
        kern,
        out_shape=jax.ShapeDtypeStruct((H_pad, L_pad), jnp.float32),
        grid_spec=pltpu.PrefetchScalarGridSpec(
            num_scalar_prefetch=0,
            grid=grid,
            in_specs=[cj_spec, cj_spec, p_spec, p_spec],
            out_specs=out_spec,
        ),
        compiler_params=pltpu.CompilerParams(
            dimension_semantics=("parallel", "parallel"),
            vmem_limit_bytes=vmem_limit,
        ),
        cost_estimate=pl.CostEstimate(
            flops=flops, transcendentals=0, bytes_accessed=bytes_accessed),
    )(cj_r, cj_i, P_r, P_i)

    return K_pad[:H, :L]


# ----------------------------------------------------------------------------
# Plain-JAX glue: S4D layer + token classifier (eval mode, dropout = identity)
# ----------------------------------------------------------------------------
def _layer_norm(x, gamma, beta, eps=1e-5):
    mu = jnp.mean(x, axis=-1, keepdims=True)
    var = jnp.var(x, axis=-1, keepdims=True)
    return (x - mu) * lax.rsqrt(var + eps) * gamma + beta


def _s4d_layer_apply(p, u):
    """S4D block: FFT conv with the Pallas-generated kernel + GELU + GLU. u:(B,H,L)."""
    B, H, L = u.shape
    k = s4d_kernel_forward(p["log_dt"], p["C_real"], p["C_imag"],
                           p["log_A_real"], p["A_imag"], L=L)   # (H, L) Pallas
    n = 2 * L
    k_f = jnp.fft.rfft(k, n=n)                                  # (H, n//2+1)
    u_f = jnp.fft.rfft(u, n=n)                                  # (B, H, n//2+1)
    y = jnp.fft.irfft(u_f * k_f[None], n=n)[..., :L]
    y = y + u * p["D"][None, :, None]
    y = jax.nn.gelu(y, approximate=False)
    # TODO(synk): training-mode DropoutNd not implemented (eval -> identity).
    z = jnp.einsum("oh,bhl->bol", p["out_w"], y) + p["out_b"][None, :, None]
    a, g = jnp.split(z, 2, axis=1)                              # GLU over channels
    return a * jax.nn.sigmoid(g)


def s4d_token_classifier_forward(params, tokens):
    """Eval-mode forward of S4DTokenClassifier. tokens: (B, Lseq) int -> logits."""
    x = params["embedding"][tokens]                 # (B, Lseq, d_model)
    x = jnp.swapaxes(x, -1, -2)                     # (B, H, L)
    for lp in params["layers"]:                     # prenorm = False (post-norm)
        z = _s4d_layer_apply(lp["s4d"], x)
        x = x + z
        xt = _layer_norm(jnp.swapaxes(x, -1, -2), lp["ln_g"], lp["ln_b"])
        x = jnp.swapaxes(xt, -1, -2)
    x = jnp.swapaxes(x, -1, -2)                     # (B, L, H)
    return x @ params["head_w"].T + params["head_b"]


# ----------------------------------------------------------------------------
# Parameter init (mirrors the PyTorch __init__ shapes) and f64 reference
# ----------------------------------------------------------------------------
def _init_s4d_kernel_params(key, H, N, dt_min=0.001, dt_max=0.1):
    N2 = N // 2
    k_dt, k_cr, k_ci = jax.random.split(key, 3)
    return dict(
        log_dt=(jax.random.uniform(k_dt, (H,), dtype=jnp.float32)
                * (math.log(dt_max) - math.log(dt_min)) + math.log(dt_min)),
        C_real=jax.random.normal(k_cr, (H, N2), dtype=jnp.float32),
        C_imag=jax.random.normal(k_ci, (H, N2), dtype=jnp.float32),
        log_A_real=jnp.log(0.5 * jnp.ones((H, N2), jnp.float32)),
        A_imag=math.pi * jnp.broadcast_to(
            jnp.arange(N2, dtype=jnp.float32)[None, :], (H, N2)),
    )


def _init_classifier_params(key, d_model, d_state, n_layers, n_vocab):
    keys = jax.random.split(key, 2 + n_layers)
    emb = 0.1 * jax.random.normal(keys[0], (n_vocab + 1, d_model), jnp.float32)
    emb = emb.at[n_vocab].set(0.0)                  # padding_idx row
    layers = []
    for li in range(n_layers):
        k = jax.random.split(keys[2 + li], 3)
        s4d = _init_s4d_kernel_params(k[0], d_model, d_state)
        s4d["D"] = jax.random.normal(k[1], (d_model,), jnp.float32)
        s4d["out_w"] = (jax.random.normal(k[2], (2 * d_model, d_model), jnp.float32)
                        / math.sqrt(d_model))
        s4d["out_b"] = jnp.zeros((2 * d_model,), jnp.float32)
        layers.append(dict(s4d=s4d,
                           ln_g=jnp.ones((d_model,), jnp.float32),
                           ln_b=jnp.zeros((d_model,), jnp.float32)))
    head_w = jax.random.normal(keys[1], (n_vocab, d_model), jnp.float32) / math.sqrt(d_model)
    return dict(embedding=emb, layers=layers, head_w=head_w,
                head_b=jnp.zeros((n_vocab,), jnp.float32))


def _reference_numpy(log_dt, C_real, C_imag, log_A_real, A_imag, L):
    """Direct complex-arithmetic (float64) reference of S4DKernel.forward."""
    log_dt = np.asarray(log_dt, np.float64)
    C = np.asarray(C_real, np.float64) + 1j * np.asarray(C_imag, np.float64)
    A = -np.exp(np.asarray(log_A_real, np.float64)) + 1j * np.asarray(A_imag, np.float64)
    dt = np.exp(log_dt)
    dtA = A * dt[:, None]
    K = dtA[:, :, None] * np.arange(L)
    Cp = C * (np.exp(dtA) - 1.0) / A
    return 2.0 * np.einsum('hn,hnl->hl', Cp, np.exp(K)).real


if __name__ == "__main__":
    # --- check 1: S4D kernel vs f64 reference (tiny shapes, single L tile) ---
    H, N, L = 8, 64, 16
    kp = _init_s4d_kernel_params(jax.random.PRNGKey(0), H, N)
    K = jax.block_until_ready(
        s4d_kernel_forward(kp["log_dt"], kp["C_real"], kp["C_imag"],
                           kp["log_A_real"], kp["A_imag"], L=L))
    K_ref = _reference_numpy(np.array(kp["log_dt"]), np.array(kp["C_real"]),
                             np.array(kp["C_imag"]), np.array(kp["log_A_real"]),
                             np.array(kp["A_imag"]), L)
    np.testing.assert_allclose(np.asarray(K), K_ref, rtol=2e-4, atol=2e-4)

    # --- check 2: multi-tile L path (padding + per-block offsets, any chip) ---
    L2 = 700
    K2 = jax.block_until_ready(
        s4d_kernel_forward(kp["log_dt"], kp["C_real"], kp["C_imag"],
                           kp["log_A_real"], kp["A_imag"], L=L2))
    K2_ref = _reference_numpy(np.array(kp["log_dt"]), np.array(kp["C_real"]),
                              np.array(kp["C_imag"]), np.array(kp["log_A_real"]),
                              np.array(kp["A_imag"]), L2)
    np.testing.assert_allclose(np.asarray(K2), K2_ref, rtol=1e-3, atol=1e-3)

    # --- full token-classifier forward (eval mode), Pallas kernel inside each layer ---
    B, Lseq, d_model, d_state, n_layers, n_vocab = 2, 32, 8, 64, 2, 16
    params = _init_classifier_params(jax.random.PRNGKey(0),
                                     d_model, d_state, n_layers, n_vocab)
    tokens = jax.random.randint(jax.random.PRNGKey(1), (B, Lseq), 0, n_vocab)
    logits = jax.block_until_ready(s4d_token_classifier_forward(params, tokens))
    assert logits.shape == (B, Lseq, n_vocab)
    assert bool(jnp.all(jnp.isfinite(logits)))

    print("KERNEL_OK")
</pallas_src>

<mosaic_0001>
module attributes {stable_mosaic.version = 11 : i64} {
  func.func @_s4d_block_kernel(%arg0: i32, %arg1: i32, %arg2: memref<1x8x32xf32, #tpu.memory_space<vmem>>, %arg3: memref<1x8x32xf32, #tpu.memory_space<vmem>>, %arg4: memref<32x8x128xf32, #tpu.memory_space<vmem>>, %arg5: memref<32x8x128xf32, #tpu.memory_space<vmem>>, %arg6: memref<8x128xf32, #tpu.memory_space<vmem>>) attributes {dimension_semantics = [#tpu.dimension_semantics<parallel>, #tpu.dimension_semantics<parallel>], iteration_bounds = array<i64: 1, 1>, scalar_prefetch = 0 : i64, scratch_operands = 0 : i64, tpu.core_type = #tpu.core_type<tc>, window_params = [{transform_indices = @transform_0, window_bounds = array<i64: 1, 8, 32>}, {transform_indices = @transform_1, window_bounds = array<i64: 1, 8, 32>}, {transform_indices = @transform_2, window_bounds = array<i64: 32, 8, 128>}, {transform_indices = @transform_3, window_bounds = array<i64: 32, 8, 128>}, {transform_indices = @transform_4, window_bounds = array<i64: 8, 128>}]} {
    %c0 = arith.constant 0 : index
    %c0_0 = arith.constant 0 : index
    %c0_1 = arith.constant 0 : index
    %0 = vector.load %arg2[%c0, %c0_0, %c0_1] : memref<1x8x32xf32, #tpu.memory_space<vmem>>, vector<1x8x32xf32>
    %1 = vector.shape_cast %0 : vector<1x8x32xf32> to vector<8x32xf32>
    %c0_2 = arith.constant 0 : index
    %c0_3 = arith.constant 0 : index
    %c0_4 = arith.constant 0 : index
    %2 = vector.load %arg3[%c0_2, %c0_3, %c0_4] : memref<1x8x32xf32, #tpu.memory_space<vmem>>, vector<1x8x32xf32>
    %3 = vector.shape_cast %2 : vector<1x8x32xf32> to vector<8x32xf32>
    %cst = arith.constant 0.000000e+00 : f32
    %4 = vector.broadcast %cst : f32 to vector<8x128xf32>
    %5 = vector.extract_strided_slice %1 {offsets = [0, 0], sizes = [8, 1], strides = [1, 1]} : vector<8x32xf32> to vector<8x1xf32>
    %c0_5 = arith.constant 0 : index
    %c0_6 = arith.constant 0 : index
    %c0_7 = arith.constant 0 : index
    %6 = vector.load %arg4[%c0_5, %c0_6, %c0_7] : memref<32x8x128xf32, #tpu.memory_space<vmem>>, vector<1x8x128xf32>
    %7 = vector.shape_cast %6 : vector<1x8x128xf32> to vector<8x128xf32>
    %8 = vector.broadcast %5 : vector<8x1xf32> to vector<8x128xf32>
    %9 = arith.mulf %8, %7 : vector<8x128xf32>
    %10 = arith.addf %4, %9 : vector<8x128xf32>
    %11 = vector.extract_strided_slice %3 {offsets = [0, 0], sizes = [8, 1], strides = [1, 1]} : vector<8x32xf32> to vector<8x1xf32>
    %c0_8 = arith.constant 0 : index
    %c0_9 = arith.constant 0 : index
    %c0_10 = arith.constant 0 : index
    %12 = vector.load %arg5[%c0_8, %c0_9, %c0_10] : memref<32x8x128xf32, #tpu.memory_space<vmem>>, vector<1x8x128xf32>
    %13 = vector.shape_cast %12 : vector<1x8x128xf32> to vector<8x128xf32>
    %14 = vector.broadcast %11 : vector<8x1xf32> to vector<8x128xf32>
    %15 = arith.mulf %14, %13 : vector<8x128xf32>
    %16 = arith.subf %10, %15 : vector<8x128xf32>
    %17 = vector.extract_strided_slice %1 {offsets = [0, 1], sizes = [8, 1], strides = [1, 1]} : vector<8x32xf32> to vector<8x1xf32>
    %c1 = arith.constant 1 : index
    %c0_11 = arith.constant 0 : index
    %c0_12 = arith.constant 0 : index
    %18 = vector.load %arg4[%c1, %c0_11, %c0_12] : memref<32x8x128xf32, #tpu.memory_space<vmem>>, vector<1x8x128xf32>
    %19 = vector.shape_cast %18 : vector<1x8x128xf32> to vector<8x128xf32>
    %20 = vector.broadcast %17 : vector<8x1xf32> to vector<8x128xf32>
    %21 = arith.mulf %20, %19 : vector<8x128xf32>
    %22 = arith.addf %16, %21 : vector<8x128xf32>
    %23 = vector.extract_strided_slice %3 {offsets = [0, 1], sizes = [8, 1], strides = [1, 1]} : vector<8x32xf32> to vector<8x1xf32>
    %c1_13 = arith.constant 1 : index
    %c0_14 = arith.constant 0 : index
    %c0_15 = arith.constant 0 : index
    %24 = vector.load %arg5[%c1_13, %c0_14, %c0_15] : memref<32x8x128xf32, #tpu.memory_space<vmem>>, vector<1x8x128xf32>
    %25 = vector.shape_cast %24 : vector<1x8x128xf32> to vector<8x128xf32>
    %26 = vector.broadcast %23 : vector<8x1xf32> to vector<8x128xf32>
    %27 = arith.mulf %26, %25 : vector<8x128xf32>
    %28 = arith.subf %22, %27 : vector<8x128xf32>
    %29 = vector.extract_strided_slice %1 {offsets = [0, 2], sizes = [8, 1], strides = [1, 1]} : vector<8x32xf32> to vector<8x1xf32>
    %c2 = arith.constant 2 : index
    %c0_16 = arith.constant 0 : index
    %c0_17 = arith.constant 0 : index
    %30 = vector.load %arg4[%c2, %c0_16, %c0_17] : memref<32x8x128xf32, #tpu.memory_space<vmem>>, vector<1x8x128xf32>
    %31 = vector.shape_cast %30 : vector<1x8x128xf32> to vector<8x128xf32>
    %32 = vector.broadcast %29 : vector<8x1xf32> to vector<8x128xf32>
    %33 = arith.mulf %32, %31 : vector<8x128xf32>
    %34 = arith.addf %28, %33 : vector<8x128xf32>
    %35 = vector.extract_strided_slice %3 {offsets = [0, 2], sizes = [8, 1], strides = [1, 1]} : vector<8x32xf32> to vector<8x1xf32>
    %c2_18 = arith.constant 2 : index
    %c0_19 = arith.constant 0 : index
    %c0_20 = arith.constant 0 : index
    %36 = vector.load %arg5[%c2_18, %c0_19, %c0_20] : memref<32x8x128xf32, #tpu.memory_space<vmem>>, vector<1x8x128xf32>
    %37 = vector.shape_cast %36 : vector<1x8x128xf32> to vector<8x128xf32>
    %38 = vector.broadcast %35 : vector<8x1xf32> to vector<8x128xf32>
    %39 = arith.mulf %38, %37 : vector<8x128xf32>
    %40 = arith.subf %34, %39 : vector<8x128xf32>
    %41 = vector.extract_strided_slice %1 {offsets = [0, 3], sizes = [8, 1], strides = [1, 1]} : vector<8x32xf32> to vector<8x1xf32>
    %c3 = arith.constant 3 : index
    %c0_21 = arith.constant 0 : index
    %c0_22 = arith.constant 0 : index
    %42 = vector.load %arg4[%c3, %c0_21, %c0_22] : memref<32x8x128xf32, #tpu.memory_space<vmem>>, vector<1x8x128xf32>
    %43 = vector.shape_cast %42 : vector<1x8x128xf32> to vector<8x128xf32>
    %44 = vector.broadcast %41 : vector<8x1xf32> to vector<8x128xf32>
    %45 = arith.mulf %44, %43 : vector<8x128xf32>
    %46 = arith.addf %40, %45 : vector<8x128xf32>
    %47 = vector.extract_strided_slice %3 {offsets = [0, 3], sizes = [8, 1], strides = [1, 1]} : vector<8x32xf32> to vector<8x1xf32>
    %c3_23 = arith.constant 3 : index
    %c0_24 = arith.constant 0 : index
    %c0_25 = arith.constant 0 : index
    %48 = vector.load %arg5[%c3_23, %c0_24, %c0_25] : memref<32x8x128xf32, #tpu.memory_space<vmem>>, vector<1x8x128xf32>
    %49 = vector.shape_cast %48 : vector<1x8x128xf32> to vector<8x128xf32>
    %50 = vector.broadcast %47 : vector<8x1xf32> to vector<8x128xf32>
    %51 = arith.mulf %50, %49 : vector<8x128xf32>
    %52 = arith.subf %46, %51 : vector<8x128xf32>
    %53 = vector.extract_strided_slice %1 {offsets = [0, 4], sizes = [8, 1], strides = [1, 1]} : vector<8x32xf32> to vector<8x1xf32>
    %c4 = arith.constant 4 : index
    %c0_26 = arith.constant 0 : index
    %c0_27 = arith.constant 0 : index
    %54 = vector.load %arg4[%c4, %c0_26, %c0_27] : memref<32x8x128xf32, #tpu.memory_space<vmem>>, vector<1x8x128xf32>
    %55 = vector.shape_cast %54 : vector<1x8x128xf32> to vector<8x128xf32>
    %56 = vector.broadcast %53 : vector<8x1xf32> to vector<8x128xf32>
    %57 = arith.mulf %56, %55 : vector<8x128xf32>
    %58 = arith.addf %52, %57 : vector<8x128xf32>
    %59 = vector.extract_strided_slice %3 {offsets = [0, 4], sizes = [8, 1], strides = [1, 1]} : vector<8x32xf32> to vector<8x1xf32>
    %c4_28 = arith.constant 4 : index
    %c0_29 = arith.constant 0 : index
    %c0_30 = arith.constant 0 : index
    %60 = vector.load %arg5[%c4_28, %c0_29, %c0_30] : memref<32x8x128xf32, #tpu.memory_space<vmem>>, vector<1x8x128xf32>
    %61 = vector.shape_cast %60 : vector<1x8x128xf32> to vector<8x128xf32>
    %62 = vector.broadcast %59 : vector<8x1xf32> to vector<8x128xf32>
    %63 = arith.mulf %62, %61 : vector<8x128xf32>
    %64 = arith.subf %58, %63 : vector<8x128xf32>
    %65 = vector.extract_strided_slice %1 {offsets = [0, 5], sizes = [8, 1], strides = [1, 1]} : vector<8x32xf32> to vector<8x1xf32>
    %c5 = arith.constant 5 : index
    %c0_31 = arith.constant 0 : index
    %c0_32 = arith.constant 0 : index
    %66 = vector.load %arg4[%c5, %c0_31, %c0_32] : memref<32x8x128xf32, #tpu.memory_space<vmem>>, vector<1x8x128xf32>
    %67 = vector.shape_cast %66 : vector<1x8x128xf32> to vector<8x128xf32>
    %68 = vector.broadcast %65 : vector<8x1xf32> to vector<8x128xf32>
    %69 = arith.mulf %68, %67 : vector<8x128xf32>
    %70 = arith.addf %64, %69 : vector<8x128xf32>
    %71 = vector.extract_strided_slice %3 {offsets = [0, 5], sizes = [8, 1], strides = [1, 1]} : vector<8x32xf32> to vector<8x1xf32>
    %c5_33 = arith.constant 5 : index
    %c0_34 = arith.constant 0 : index
    %c0_35 = arith.constant 0 : index
    %72 = vector.load %arg5[%c5_33, %c0_34, %c0_35] : memref<32x8x128xf32, #tpu.memory_space<vmem>>, vector<1x8x128xf32>
    %73 = vector.shape_cast %72 : vector<1x8x128xf32> to vector<8x128xf32>
    %74 = vector.broadcast %71 : vector<8x1xf32> to vector<8x128xf32>
    %75 = arith.mulf %74, %73 : vector<8x128xf32>
    %76 = arith.subf %70, %75 : vector<8x128xf32>
    %77 = vector.extract_strided_slice %1 {offsets = [0, 6], sizes = [8, 1], strides = [1, 1]} : vector<8x32xf32> to vector<8x1xf32>
    %c6 = arith.constant 6 : index
    %c0_36 = arith.constant 0 : index
    %c0_37 = arith.constant 0 : index
    %78 = vector.load %arg4[%c6, %c0_36, %c0_37] : memref<32x8x128xf32, #tpu.memory_space<vmem>>, vector<1x8x128xf32>
    %79 = vector.shape_cast %78 : vector<1x8x128xf32> to vector<8x128xf32>
    %80 = vector.broadcast %77 : vector<8x1xf32> to vector<8x128xf32>
    %81 = arith.mulf %80, %79 : vector<8x128xf32>
    %82 = arith.addf %76, %81 : vector<8x128xf32>
    %83 = vector.extract_strided_slice %3 {offsets = [0, 6], sizes = [8, 1], strides = [1, 1]} : vector<8x32xf32> to vector<8x1xf32>
    %c6_38 = arith.constant 6 : index
    %c0_39 = arith.constant 0 : index
    %c0_40 = arith.constant 0 : index
    %84 = vector.load %arg5[%c6_38, %c0_39, %c0_40] : memref<32x8x128xf32, #tpu.memory_space<vmem>>, vector<1x8x128xf32>
    %85 = vector.shape_cast %84 : vector<1x8x128xf32> to vector<8x128xf32>
    %86 = vector.broadcast %83 : vector<8x1xf32> to vector<8x128xf32>
    %87 = arith.mulf %86, %85 : vector<8x128xf32>
    %88 = arith.subf %82, %87 : vector<8x128xf32>
    %89 = vector.extract_strided_slice %1 {offsets = [0, 7], sizes = [8, 1], strides = [1, 1]} : vector<8x32xf32> to vector<8x1xf32>
    %c7 = arith.constant 7 : index
    %c0_41 = arith.constant 0 : index
    %c0_42 = arith.constant 0 : index
    %90 = vector.load %arg4[%c7, %c0_41, %c0_42] : memref<32x8x128xf32, #tpu.memory_space<vmem>>, vector<1x8x128xf32>
    %91 = vector.shape_cast %90 : vector<1x8x128xf32> to vector<8x128xf32>
    %92 = vector.broadcast %89 : vector<8x1xf32> to vector<8x128xf32>
    %93 = arith.mulf %92, %91 : vector<8x128xf32>
    %94 = arith.addf %88, %93 : vector<8x128xf32>
    %95 = vector.extract_strided_slice %3 {offsets = [0, 7], sizes = [8, 1], strides = [1, 1]} : vector<8x32xf32> to vector<8x1xf32>
    %c7_43 = arith.constant 7 : index
    %c0_44 = arith.constant 0 : index
    %c0_45 = arith.constant 0 : index
    %96 = vector.load %arg5[%c7_43, %c0_44, %c0_45] : memref<32x8x128xf32, #tpu.memory_space<vmem>>, vector<1x8x128xf32>
    %97 = vector.shape_cast %96 : vector<1x8x128xf32> to vector<8x128xf32>
    %98 = vector.broadcast %95 : vector<8x1xf32> to vector<8x128xf32>
    %99 = arith.mulf %98, %97 : vector<8x128xf32>
    %100 = arith.subf %94, %99 : vector<8x128xf32>
    %101 = vector.extract_strided_slice %1 {offsets = [0, 8], sizes = [8, 1], strides = [1, 1]} : vector<8x32xf32> to vector<8x1xf32>
    %c8 = arith.constant 8 : index
    %c0_46 = arith.constant 0 : index
    %c0_47 = arith.constant 0 : index
    %102 = vector.load %arg4[%c8, %c0_46, %c0_47] : memref<32x8x128xf32, #tpu.memory_space<vmem>>, vector<1x8x128xf32>
    %103 = vector.shape_cast %102 : vector<1x8x128xf32> to vector<8x128xf32>
    %104 = vector.broadcast %101 : vector<8x1xf32> to vector<8x128xf32>
    %105 = arith.mulf %104, %103 : vector<8x128xf32>
    %106 = arith.addf %100, %105 : vector<8x128xf32>
    %107 = vector.extract_strided_slice %3 {offsets = [0, 8], sizes = [8, 1], strides = [1, 1]} : vector<8x32xf32> to vector<8x1xf32>
    %c8_48 = arith.constant 8 : index
    %c0_49 = arith.constant 0 : index
    %c0_50 = arith.constant 0 : index
    %108 = vector.load %arg5[%c8_48, %c0_49, %c0_50] : memref<32x8x128xf32, #tpu.memory_space<vmem>>, vector<1x8x128xf32>
    %109 = vector.shape_cast %108 : vector<1x8x128xf32> to vector<8x128xf32>
    %110 = vector.broadcast %107 : vector<8x1xf32> to vector<8x128xf32>
    %111 = arith.mulf %110, %109 : vector<8x128xf32>
    %112 = arith.subf %106, %111 : vector<8x128xf32>
    %113 = vector.extract_strided_slice %1 {offsets = [0, 9], sizes = [8, 1], strides = [1, 1]} : vector<8x32xf32> to vector<8x1xf32>
    %c9 = arith.constant 9 : index
    %c0_51 = arith.constant 0 : index
    %c0_52 = arith.constant 0 : index
    %114 = vector.load %arg4[%c9, %c0_51, %c0_52] : memref<32x8x128xf32, #tpu.memory_space<vmem>>, vector<1x8x128xf32>
    %115 = vector.shape_cast %114 : vector<1x8x128xf32> to vector<8x128xf32>
    %116 = vector.broadcast %113 : vector<8x1xf32> to vector<8x128xf32>
    %117 = arith.mulf %116, %115 : vector<8x128xf32>
    %118 = arith.addf %112, %117 : vector<8x128xf32>
    %119 = vector.extract_strided_slice %3 {offsets = [0, 9], sizes = [8, 1], strides = [1, 1]} : vector<8x32xf32> to vector<8x1xf32>
    %c9_53 = arith.constant 9 : index
    %c0_54 = arith.constant 0 : index
    %c0_55 = arith.constant 0 : index
    %120 = vector.load %arg5[%c9_53, %c0_54, %c0_55] : memref<32x8x128xf32, #tpu.memory_space<vmem>>, vector<1x8x128xf32>
    %121 = vector.shape_cast %120 : vector<1x8x128xf32> to vector<8x128xf32>
    %122 = vector.broadcast %119 : vector<8x1xf32> to vector<8x128xf32>
    %123 = arith.mulf %122, %121 : vector<8x128xf32>
    %124 = arith.subf %118, %123 : vector<8x128xf32>
    %125 = vector.extract_strided_slice %1 {offsets = [0, 10], sizes = [8, 1], strides = [1, 1]} : vector<8x32xf32> to vector<8x1xf32>
    %c10 = arith.constant 10 : index
    %c0_56 = arith.constant 0 : index
    %c0_57 = arith.constant 0 : index
    %126 = vector.load %arg4[%c10, %c0_56, %c0_57] : memref<32x8x128xf32, #tpu.memory_space<vmem>>, vector<1x8x128xf32>
    %127 = vector.shape_cast %126 : vector<1x8x128xf32> to vector<8x128xf32>
    %128 = vector.broadcast %125 : vector<8x1xf32> to vector<8x128xf32>
    %129 = arith.mulf %128, %127 : vector<8x128xf32>
    %130 = arith.addf %124, %129 : vector<8x128xf32>
    %131 = vector.extract_strided_slice %3 {offsets = [0, 10], sizes = [8, 1], strides = [1, 1]} : vector<8x32xf32> to vector<8x1xf32>
    %c10_58 = arith.constant 10 : index
    %c0_59 = arith.constant 0 : index
    %c0_60 = arith.constant 0 : index
    %132 = vector.load %arg5[%c10_58, %c0_59, %c0_60] : memref<32x8x128xf32, #tpu.memory_space<vmem>>, vector<1x8x128xf32>
    %133 = vector.shape_cast %132 : vector<1x8x128xf32> to vector<8x128xf32>
    %134 = vector.broadcast %131 : vector<8x1xf32> to vector<8x128xf32>
    %135 = arith.mulf %134, %133 : vector<8x128xf32>
    %136 = arith.subf %130, %135 : vector<8x128xf32>
    %137 = vector.extract_strided_slice %1 {offsets = [0, 11], sizes = [8, 1], strides = [1, 1]} : vector<8x32xf32> to vector<8x1xf32>
    %c11 = arith.constant 11 : index
    %c0_61 = arith.constant 0 : index
    %c0_62 = arith.constant 0 : index
    %138 = vector.load %arg4[%c11, %c0_61, %c0_62] : memref<32x8x128xf32, #tpu.memory_space<vmem>>, vector<1x8x128xf32>
    %139 = vector.shape_cast %138 : vector<1x8x128xf32> to vector<8x128xf32>
    %140 = vector.broadcast %137 : vector<8x1xf32> to vector<8x128xf32>
    %141 = arith.mulf %140, %139 : vector<8x128xf32>
    %142 = arith.addf %136, %141 : vector<8x128xf32>
    %143 = vector.extract_strided_slice %3 {offsets = [0, 11], sizes = [8, 1], strides = [1, 1]} : vector<8x32xf32> to vector<8x1xf32>
    %c11_63 = arith.constant 11 : index
    %c0_64 = arith.constant 0 : index
    %c0_65 = arith.constant 0 : index
    %144 = vector.load %arg5[%c11_63, %c0_64, %c0_65] : memref<32x8x128xf32, #tpu.memory_space<vmem>>, vector<1x8x128xf32>
    %145 = vector.shape_cast %144 : vector<1x8x128xf32> to vector<8x128xf32>
    %146 = vector.broadcast %143 : vector<8x1xf32> to vector<8x128xf32>
    %147 = arith.mulf %146, %145 : vector<8x128xf32>
    %148 = arith.subf %142, %147 : vector<8x128xf32>
    %149 = vector.extract_strided_slice %1 {offsets = [0, 12], sizes = [8, 1], strides = [1, 1]} : vector<8x32xf32> to vector<8x1xf32>
    %c12 = arith.constant 12 : index
    %c0_66 = arith.constant 0 : index
    %c0_67 = arith.constant 0 : index
    %150 = vector.load %arg4[%c12, %c0_66, %c0_67] : memref<32x8x128xf32, #tpu.memory_space<vmem>>, vector<1x8x128xf32>
    %151 = vector.shape_cast %150 : vector<1x8x128xf32> to vector<8x128xf32>
    %152 = vector.broadcast %149 : vector<8x1xf32> to vector<8x128xf32>
    %153 = arith.mulf %152, %151 : vector<8x128xf32>
    %154 = arith.addf %148, %153 : vector<8x128xf32>
    %155 = vector.extract_strided_slice %3 {offsets = [0, 12], sizes = [8, 1], strides = [1, 1]} : vector<8x32xf32> to vector<8x1xf32>
    %c12_68 = arith.constant 12 : index
    %c0_69 = arith.constant 0 : index
    %c0_70 = arith.constant 0 : index
    %156 = vector.load %arg5[%c12_68, %c0_69, %c0_70] : memref<32x8x128xf32, #tpu.memory_space<vmem>>, vector<1x8x128xf32>
    %157 = vector.shape_cast %156 : vector<1x8x128xf32> to vector<8x128xf32>
    %158 = vector.broadcast %155 : vector<8x1xf32> to vector<8x128xf32>
    %159 = arith.mulf %158, %157 : vector<8x128xf32>
    %160 = arith.subf %154, %159 : vector<8x128xf32>
    %161 = vector.extract_strided_slice %1 {offsets = [0, 13], sizes = [8, 1], strides = [1, 1]} : vector<8x32xf32> to vector<8x1xf32>
    %c13 = arith.constant 13 : index
    %c0_71 = arith.constant 0 : index
    %c0_72 = arith.constant 0 : index
    %162 = vector.load %arg4[%c13, %c0_71, %c0_72] : memref<32x8x128xf32, #tpu.memory_space<vmem>>, vector<1x8x128xf32>
    %163 = vector.shape_cast %162 : vector<1x8x128xf32> to vector<8x128xf32>
    %164 = vector.broadcast %161 : vector<8x1xf32> to vector<8x128xf32>
    %165 = arith.mulf %164, %163 : vector<8x128xf32>
    %166 = arith.addf %160, %165 : vector<8x128xf32>
    %167 = vector.extract_strided_slice %3 {offsets = [0, 13], sizes = [8, 1], strides = [1, 1]} : vector<8x32xf32> to vector<8x1xf32>
    %c13_73 = arith.constant 13 : index
    %c0_74 = arith.constant 0 : index
    %c0_75 = arith.constant 0 : index
    %168 = vector.load %arg5[%c13_73, %c0_74, %c0_75] : memref<32x8x128xf32, #tpu.memory_space<vmem>>, vector<1x8x128xf32>
    %169 = vector.shape_cast %168 : vector<1x8x128xf32> to vector<8x128xf32>
    %170 = vector.broadcast %167 : vector<8x1xf32> to vector<8x128xf32>
    %171 = arith.mulf %170, %169 : vector<8x128xf32>
    %172 = arith.subf %166, %171 : vector<8x128xf32>
    %173 = vector.extract_strided_slice %1 {offsets = [0, 14], sizes = [8, 1], strides = [1, 1]} : vector<8x32xf32> to vector<8x1xf32>
    %c14 = arith.constant 14 : index
    %c0_76 = arith.constant 0 : index
    %c0_77 = arith.constant 0 : index
    %174 = vector.load %arg4[%c14, %c0_76, %c0_77] : memref<32x8x128xf32, #tpu.memory_space<vmem>>, vector<1x8x128xf32>
    %175 = vector.shape_cast %174 : vector<1x8x128xf32> to vector<8x128xf32>
    %176 = vector.broadcast %173 : vector<8x1xf32> to vector<8x128xf32>
    %177 = arith.mulf %176, %175 : vector<8x128xf32>
    %178 = arith.addf %172, %177 : vector<8x128xf32>
    %179 = vector.extract_strided_slice %3 {offsets = [0, 14], sizes = [8, 1], strides = [1, 1]} : vector<8x32xf32> to vector<8x1xf32>
    %c14_78 = arith.constant 14 : index
    %c0_79 = arith.constant 0 : index
    %c0_80 = arith.constant 0 : index
    %180 = vector.load %arg5[%c14_78, %c0_79, %c0_80] : memref<32x8x128xf32, #tpu.memory_space<vmem>>, vector<1x8x128xf32>
    %181 = vector.shape_cast %180 : vector<1x8x128xf32> to vector<8x128xf32>
    %182 = vector.broadcast %179 : vector<8x1xf32> to vector<8x128xf32>
    %183 = arith.mulf %182, %181 : vector<8x128xf32>
    %184 = arith.subf %178, %183 : vector<8x128xf32>
    %185 = vector.extract_strided_slice %1 {offsets = [0, 15], sizes = [8, 1], strides = [1, 1]} : vector<8x32xf32> to vector<8x1xf32>
    %c15 = arith.constant 15 : index
    %c0_81 = arith.constant 0 : index
    %c0_82 = arith.constant 0 : index
    %186 = vector.load %arg4[%c15, %c0_81, %c0_82] : memref<32x8x128xf32, #tpu.memory_space<vmem>>, vector<1x8x128xf32>
    %187 = vector.shape_cast %186 : vector<1x8x128xf32> to vector<8x128xf32>
    %188 = vector.broadcast %185 : vector<8x1xf32> to vector<8x128xf32>
    %189 = arith.mulf %188, %187 : vector<8x128xf32>
    %190 = arith.addf %184, %189 : vector<8x128xf32>
    %191 = vector.extract_strided_slice %3 {offsets = [0, 15], sizes = [8, 1], strides = [1, 1]} : vector<8x32xf32> to vector<8x1xf32>
    %c15_83 = arith.constant 15 : index
    %c0_84 = arith.constant 0 : index
    %c0_85 = arith.constant 0 : index
    %192 = vector.load %arg5[%c15_83, %c0_84, %c0_85] : memref<32x8x128xf32, #tpu.memory_space<vmem>>, vector<1x8x128xf32>
    %193 = vector.shape_cast %192 : vector<1x8x128xf32> to vector<8x128xf32>
    %194 = vector.broadcast %191 : vector<8x1xf32> to vector<8x128xf32>
    %195 = arith.mulf %194, %193 : vector<8x128xf32>
    %196 = arith.subf %190, %195 : vector<8x128xf32>
    %197 = vector.extract_strided_slice %1 {offsets = [0, 16], sizes = [8, 1], strides = [1, 1]} : vector<8x32xf32> to vector<8x1xf32>
    %c16 = arith.constant 16 : index
    %c0_86 = arith.constant 0 : index
    %c0_87 = arith.constant 0 : index
    %198 = vector.load %arg4[%c16, %c0_86, %c0_87] : memref<32x8x128xf32, #tpu.memory_space<vmem>>, vector<1x8x128xf32>
    %199 = vector.shape_cast %198 : vector<1x8x128xf32> to vector<8x128xf32>
    %200 = vector.broadcast %197 : vector<8x1xf32> to vector<8x128xf32>
    %201 = arith.mulf %200, %199 : vector<8x128xf32>
    %202 = arith.addf %196, %201 : vector<8x128xf32>
    %203 = vector.extract_strided_slice %3 {offsets = [0, 16], sizes = [8, 1], strides = [1, 1]} : vector<8x32xf32> to vector<8x1xf32>
    %c16_88 = arith.constant 16 : index
    %c0_89 = arith.constant 0 : index
    %c0_90 = arith.constant 0 : index
    %204 = vector.load %arg5[%c16_88, %c0_89, %c0_90] : memref<32x8x128xf32, #tpu.memory_space<vmem>>, vector<1x8x128xf32>
    %205 = vector.shape_cast %204 : vector<1x8x128xf32> to vector<8x128xf32>
    %206 = vector.broadcast %203 : vector<8x1xf32> to vector<8x128xf32>
    %207 = arith.mulf %206, %205 : vector<8x128xf32>
    %208 = arith.subf %202, %207 : vector<8x128xf32>
    %209 = vector.extract_strided_slice %1 {offsets = [0, 17], sizes = [8, 1], strides = [1, 1]} : vector<8x32xf32> to vector<8x1xf32>
    %c17 = arith.constant 17 : index
    %c0_91 = arith.constant 0 : index
    %c0_92 = arith.constant 0 : index
    %210 = vector.load %arg4[%c17, %c0_91, %c0_92] : memref<32x8x128xf32, #tpu.memory_space<vmem>>, vector<1x8x128xf32>
    %211 = vector.shape_cast %210 : vector<1x8x128xf32> to vector<8x128xf32>
    %212 = vector.broadcast %209 : vector<8x1xf32> to vector<8x128xf32>
    %213 = arith.mulf %212, %211 : vector<8x128xf32>
    %214 = arith.addf %208, %213 : vector<8x128xf32>
    %215 = vector.extract_strided_slice %3 {offsets = [0, 17], sizes = [8, 1], strides = [1, 1]} : vector<8x32xf32> to vector<8x1xf32>
    %c17_93 = arith.constant 17 : index
    %c0_94 = arith.constant 0 : index
    %c0_95 = arith.constant 0 : index
    %216 = vector.load %arg5[%c17_93, %c0_94, %c0_95] : memref<32x8x128xf32, #tpu.memory_space<vmem>>, vector<1x8x128xf32>
    %217 = vector.shape_cast %216 : vector<1x8x128xf32> to vector<8x128xf32>
    %218 = vector.broadcast %215 : vector<8x1xf32> to vector<8x128xf32>
    %219 = arith.mulf %218, %217 : vector<8x128xf32>
    %220 = arith.subf %214, %219 : vector<8x128xf32>
    %221 = vector.extract_strided_slice %1 {offsets = [0, 18], sizes = [8, 1], strides = [1, 1]} : vector<8x32xf32> to vector<8x1xf32>
    %c18 = arith.constant 18 : index
    %c0_96 = arith.constant 0 : index
    %c0_97 = arith.constant 0 : index
    %222 = vector.load %arg4[%c18, %c0_96, %c0_97] : memref<32x8x128xf32, #tpu.memory_space<vmem>>, vector<1x8x128xf32>
    %223 = vector.shape_cast %222 : vector<1x8x128xf32> to vector<8x128xf32>
    %224 = vector.broadcast %221 : vector<8x1xf32> to vector<8x128xf32>
    %225 = arith.mulf %224, %223 : vector<8x128xf32>
    %226 = arith.addf %220, %225 : vector<8x128xf32>
    %227 = vector.extract_strided_slice %3 {offsets = [0, 18], sizes = [8, 1], strides = [1, 1]} : vector<8x32xf32> to vector<8x1xf32>
    %c18_98 = arith.constant 18 : index
    %c0_99 = arith.constant 0 : index
    %c0_100 = arith.constant 0 : index
    %228 = vector.load %arg5[%c18_98, %c0_99, %c0_100] : memref<32x8x128xf32, #tpu.memory_space<vmem>>, vector<1x8x128xf32>
    %229 = vector.shape_cast %228 : vector<1x8x128xf32> to vector<8x128xf32>
    %230 = vector.broadcast %227 : vector<8x1xf32> to vector<8x128xf32>
    %231 = arith.mulf %230, %229 : vector<8x128xf32>
    %232 = arith.subf %226, %231 : vector<8x128xf32>
    %233 = vector.extract_strided_slice %1 {offsets = [0, 19], sizes = [8, 1], strides = [1, 1]} : vector<8x32xf32> to vector<8x1xf32>
    %c19 = arith.constant 19 : index
    %c0_101 = arith.constant 0 : index
    %c0_102 = arith.constant 0 : index
    %234 = vector.load %arg4[%c19, %c0_101, %c0_102] : memref<32x8x128xf32, #tpu.memory_space<vmem>>, vector<1x8x128xf32>
    %235 = vector.shape_cast %234 : vector<1x8x128xf32> to vector<8x128xf32>
    %236 = vector.broadcast %233 : vector<8x1xf32> to vector<8x128xf32>
    %237 = arith.mulf %236, %235 : vector<8x128xf32>
    %238 = arith.addf %232, %237 : vector<8x128xf32>
    %239 = vector.extract_strided_slice %3 {offsets = [0, 19], sizes = [8, 1], strides = [1, 1]} : vector<8x32xf32> to vector<8x1xf32>
    %c19_103 = arith.constant 19 : index
    %c0_104 = arith.constant 0 : index
    %c0_105 = arith.constant 0 : index
    %240 = vector.load %arg5[%c19_103, %c0_104, %c0_105] : memref<32x8x128xf32, #tpu.memory_space<vmem>>, vector<1x8x128xf32>
    %241 = vector.shape_cast %240 : vector<1x8x128xf32> to vector<8x128xf32>
    %242 = vector.broadcast %239 : vector<8x1xf32> to vector<8x128xf32>
    %243 = arith.mulf %242, %241 : vector<8x128xf32>
    %244 = arith.subf %238, %243 : vector<8x128xf32>
    %245 = vector.extract_strided_slice %1 {offsets = [0, 20], sizes = [8, 1], strides = [1, 1]} : vector<8x32xf32> to vector<8x1xf32>
    %c20 = arith.constant 20 : index
    %c0_106 = arith.constant 0 : index
    %c0_107 = arith.constant 0 : index
    %246 = vector.load %arg4[%c20, %c0_106, %c0_107] : memref<32x8x128xf32, #tpu.memory_space<vmem>>, vector<1x8x128xf32>
    %247 = vector.shape_cast %246 : vector<1x8x128xf32> to vector<8x128xf32>
    %248 = vector.broadcast %245 : vector<8x1xf32> to vector<8x128xf32>
    %249 = arith.mulf %248, %247 : vector<8x128xf32>
    %250 = arith.addf %244, %249 : vector<8x128xf32>
    %251 = vector.extract_strided_slice %3 {offsets = [0, 20], sizes = [8, 1], strides = [1, 1]} : vector<8x32xf32> to vector<8x1xf32>
    %c20_108 = arith.constant 20 : index
    %c0_109 = arith.constant 0 : index
    %c0_110 = arith.constant 0 : index
    %252 = vector.load %arg5[%c20_108, %c0_109, %c0_110] : memref<32x8x128xf32, #tpu.memory_space<vmem>>, vector<1x8x128xf32>
    %253 = vector.shape_cast %252 : vector<1x8x128xf32> to vector<8x128xf32>
    %254 = vector.broadcast %251 : vector<8x1xf32> to vector<8x128xf32>
    %255 = arith.mulf %254, %253 : vector<8x128xf32>
    %256 = arith.subf %250, %255 : vector<8x128xf32>
    %257 = vector.extract_strided_slice %1 {offsets = [0, 21], sizes = [8, 1], strides = [1, 1]} : vector<8x32xf32> to vector<8x1xf32>
    %c21 = arith.constant 21 : index
    %c0_111 = arith.constant 0 : index
    %c0_112 = arith.constant 0 : index
    %258 = vector.load %arg4[%c21, %c0_111, %c0_112] : memref<32x8x128xf32, #tpu.memory_space<vmem>>, vector<1x8x128xf32>
    %259 = vector.shape_cast %258 : vector<1x8x128xf32> to vector<8x128xf32>
    %260 = vector.broadcast %257 : vector<8x1xf32> to vector<8x128xf32>
    %261 = arith.mulf %260, %259 : vector<8x128xf32>
    %262 = arith.addf %256, %261 : vector<8x128xf32>
    %263 = vector.extract_strided_slice %3 {offsets = [0, 21], sizes = [8, 1], strides = [1, 1]} : vector<8x32xf32> to vector<8x1xf32>
    %c21_113 = arith.constant 21 : index
    %c0_114 = arith.constant 0 : index
    %c0_115 = arith.constant 0 : index
    %264 = vector.load %arg5[%c21_113, %c0_114, %c0_115] : memref<32x8x128xf32, #tpu.memory_space<vmem>>, vector<1x8x128xf32>
    %265 = vector.shape_cast %264 : vector<1x8x128xf32> to vector<8x128xf32>
    %266 = vector.broadcast %263 : vector<8x1xf32> to vector<8x128xf32>
    %267 = arith.mulf %266, %265 : vector<8x128xf32>
    %268 = arith.subf %262, %267 : vector<8x128xf32>
    %269 = vector.extract_strided_slice %1 {offsets = [0, 22], sizes = [8, 1], strides = [1, 1]} : vector<8x32xf32> to vector<8x1xf32>
    %c22 = arith.constant 22 : index
    %c0_116 = arith.constant 0 : index
    %c0_117 = arith.constant 0 : index
    %270 = vector.load %arg4[%c22, %c0_116, %c0_117] : memref<32x8x128xf32, #tpu.memory_space<vmem>>, vector<1x8x128xf32>
    %271 = vector.shape_cast %270 : vector<1x8x128xf32> to vector<8x128xf32>
    %272 = vector.broadcast %269 : vector<8x1xf32> to vector<8x128xf32>
    %273 = arith.mulf %272, %271 : vector<8x128xf32>
    %274 = arith.addf %268, %273 : vector<8x128xf32>
    %275 = vector.extract_strided_slice %3 {offsets = [0, 22], sizes = [8, 1], strides = [1, 1]} : vector<8x32xf32> to vector<8x1xf32>
    %c22_118 = arith.constant 22 : index
    %c0_119 = arith.constant 0 : index
    %c0_120 = arith.constant 0 : index
    %276 = vector.load %arg5[%c22_118, %c0_119, %c0_120] : memref<32x8x128xf32, #tpu.memory_space<vmem>>, vector<1x8x128xf32>
    %277 = vector.shape_cast %276 : vector<1x8x128xf32> to vector<8x128xf32>
    %278 = vector.broadcast %275 : vector<8x1xf32> to vector<8x128xf32>
    %279 = arith.mulf %278, %277 : vector<8x128xf32>
    %280 = arith.subf %274, %279 : vector<8x128xf32>
    %281 = vector.extract_strided_slice %1 {offsets = [0, 23], sizes = [8, 1], strides = [1, 1]} : vector<8x32xf32> to vector<8x1xf32>
    %c23 = arith.constant 23 : index
    %c0_121 = arith.constant 0 : index
    %c0_122 = arith.constant 0 : index
    %282 = vector.load %arg4[%c23, %c0_121, %c0_122] : memref<32x8x128xf32, #tpu.memory_space<vmem>>, vector<1x8x128xf32>
    %283 = vector.shape_cast %282 : vector<1x8x128xf32> to vector<8x128xf32>
    %284 = vector.broadcast %281 : vector<8x1xf32> to vector<8x128xf32>
    %285 = arith.mulf %284, %283 : vector<8x128xf32>
    %286 = arith.addf %280, %285 : vector<8x128xf32>
    %287 = vector.extract_strided_slice %3 {offsets = [0, 23], sizes = [8, 1], strides = [1, 1]} : vector<8x32xf32> to vector<8x1xf32>
    %c23_123 = arith.constant 23 : index
    %c0_124 = arith.constant 0 : index
    %c0_125 = arith.constant 0 : index
    %288 = vector.load %arg5[%c23_123, %c0_124, %c0_125] : memref<32x8x128xf32, #tpu.memory_space<vmem>>, vector<1x8x128xf32>
    %289 = vector.shape_cast %288 : vector<1x8x128xf32> to vector<8x128xf32>
    %290 = vector.broadcast %287 : vector<8x1xf32> to vector<8x128xf32>
    %291 = arith.mulf %290, %289 : vector<8x128xf32>
    %292 = arith.subf %286, %291 : vector<8x128xf32>
    %293 = vector.extract_strided_slice %1 {offsets = [0, 24], sizes = [8, 1], strides = [1, 1]} : vector<8x32xf32> to vector<8x1xf32>
    %c24 = arith.constant 24 : index
    %c0_126 = arith.constant 0 : index
    %c0_127 = arith.constant 0 : index
    %294 = vector.load %arg4[%c24, %c0_126, %c0_127] : memref<32x8x128xf32, #tpu.memory_space<vmem>>, vector<1x8x128xf32>
    %295 = vector.shape_cast %294 : vector<1x8x128xf32> to vector<8x128xf32>
    %296 = vector.broadcast %293 : vector<8x1xf32> to vector<8x128xf32>
    %297 = arith.mulf %296, %295 : vector<8x128xf32>
    %298 = arith.addf %292, %297 : vector<8x128xf32>
    %299 = vector.extract_strided_slice %3 {offsets = [0, 24], sizes = [8, 1], strides = [1, 1]} : vector<8x32xf32> to vector<8x1xf32>
    %c24_128 = arith.constant 24 : index
    %c0_129 = arith.constant 0 : index
    %c0_130 = arith.constant 0 : index
    %300 = vector.load %arg5[%c24_128, %c0_129, %c0_130] : memref<32x8x128xf32, #tpu.memory_space<vmem>>, vector<1x8x128xf32>
    %301 = vector.shape_cast %300 : vector<1x8x128xf32> to vector<8x128xf32>
    %302 = vector.broadcast %299 : vector<8x1xf32> to vector<8x128xf32>
    %303 = arith.mulf %302, %301 : vector<8x128xf32>
    %304 = arith.subf %298, %303 : vector<8x128xf32>
    %305 = vector.extract_strided_slice %1 {offsets = [0, 25], sizes = [8, 1], strides = [1, 1]} : vector<8x32xf32> to vector<8x1xf32>
    %c25 = arith.constant 25 : index
    %c0_131 = arith.constant 0 : index
    %c0_132 = arith.constant 0 : index
    %306 = vector.load %arg4[%c25, %c0_131, %c0_132] : memref<32x8x128xf32, #tpu.memory_space<vmem>>, vector<1x8x128xf32>
    %307 = vector.shape_cast %306 : vector<1x8x128xf32> to vector<8x128xf32>
    %308 = vector.broadcast %305 : vector<8x1xf32> to vector<8x128xf32>
    %309 = arith.mulf %308, %307 : vector<8x128xf32>
    %310 = arith.addf %304, %309 : vector<8x128xf32>
    %311 = vector.extract_strided_slice %3 {offsets = [0, 25], sizes = [8, 1], strides = [1, 1]} : vector<8x32xf32> to vector<8x1xf32>
    %c25_133 = arith.constant 25 : index
    %c0_134 = arith.constant 0 : index
    %c0_135 = arith.constant 0 : index
    %312 = vector.load %arg5[%c25_133, %c0_134, %c0_135] : memref<32x8x128xf32, #tpu.memory_space<vmem>>, vector<1x8x128xf32>
    %313 = vector.shape_cast %312 : vector<1x8x128xf32> to vector<8x128xf32>
    %314 = vector.broadcast %311 : vector<8x1xf32> to vector<8x128xf32>
    %315 = arith.mulf %314, %313 : vector<8x128xf32>
    %316 = arith.subf %310, %315 : vector<8x128xf32>
    %317 = vector.extract_strided_slice %1 {offsets = [0, 26], sizes = [8, 1], strides = [1, 1]} : vector<8x32xf32> to vector<8x1xf32>
    %c26 = arith.constant 26 : index
    %c0_136 = arith.constant 0 : index
    %c0_137 = arith.constant 0 : index
    %318 = vector.load %arg4[%c26, %c0_136, %c0_137] : memref<32x8x128xf32, #tpu.memory_space<vmem>>, vector<1x8x128xf32>
    %319 = vector.shape_cast %318 : vector<1x8x128xf32> to vector<8x128xf32>
    %320 = vector.broadcast %317 : vector<8x1xf32> to vector<8x128xf32>
    %321 = arith.mulf %320, %319 : vector<8x128xf32>
    %322 = arith.addf %316, %321 : vector<8x128xf32>
    %323 = vector.extract_strided_slice %3 {offsets = [0, 26], sizes = [8, 1], strides = [1, 1]} : vector<8x32xf32> to vector<8x1xf32>
    %c26_138 = arith.constant 26 : index
    %c0_139 = arith.constant 0 : index
    %c0_140 = arith.constant 0 : index
    %324 = vector.load %arg5[%c26_138, %c0_139, %c0_140] : memref<32x8x128xf32, #tpu.memory_space<vmem>>, vector<1x8x128xf32>
    %325 = vector.shape_cast %324 : vector<1x8x128xf32> to vector<8x128xf32>
    %326 = vector.broadcast %323 : vector<8x1xf32> to vector<8x128xf32>
    %327 = arith.mulf %326, %325 : vector<8x128xf32>
    %328 = arith.subf %322, %327 : vector<8x128xf32>
    %329 = vector.extract_strided_slice %1 {offsets = [0, 27], sizes = [8, 1], strides = [1, 1]} : vector<8x32xf32> to vector<8x1xf32>
    %c27 = arith.constant 27 : index
    %c0_141 = arith.constant 0 : index
    %c0_142 = arith.constant 0 : index
    %330 = vector.load %arg4[%c27, %c0_141, %c0_142] : memref<32x8x128xf32, #tpu.memory_space<vmem>>, vector<1x8x128xf32>
    %331 = vector.shape_cast %330 : vector<1x8x128xf32> to vector<8x128xf32>
    %332 = vector.broadcast %329 : vector<8x1xf32> to vector<8x128xf32>
    %333 = arith.mulf %332, %331 : vector<8x128xf32>
    %334 = arith.addf %328, %333 : vector<8x128xf32>
    %335 = vector.extract_strided_slice %3 {offsets = [0, 27], sizes = [8, 1], strides = [1, 1]} : vector<8x32xf32> to vector<8x1xf32>
    %c27_143 = arith.constant 27 : index
    %c0_144 = arith.constant 0 : index
    %c0_145 = arith.constant 0 : index
    %336 = vector.load %arg5[%c27_143, %c0_144, %c0_145] : memref<32x8x128xf32, #tpu.memory_space<vmem>>, vector<1x8x128xf32>
    %337 = vector.shape_cast %336 : vector<1x8x128xf32> to vector<8x128xf32>
    %338 = vector.broadcast %335 : vector<8x1xf32> to vector<8x128xf32>
    %339 = arith.mulf %338, %337 : vector<8x128xf32>
    %340 = arith.subf %334, %339 : vector<8x128xf32>
    %341 = vector.extract_strided_slice %1 {offsets = [0, 28], sizes = [8, 1], strides = [1, 1]} : vector<8x32xf32> to vector<8x1xf32>
    %c28 = arith.constant 28 : index
    %c0_146 = arith.constant 0 : index
    %c0_147 = arith.constant 0 : index
    %342 = vector.load %arg4[%c28, %c0_146, %c0_147] : memref<32x8x128xf32, #tpu.memory_space<vmem>>, vector<1x8x128xf32>
    %343 = vector.shape_cast %342 : vector<1x8x128xf32> to vector<8x128xf32>
    %344 = vector.broadcast %341 : vector<8x1xf32> to vector<8x128xf32>
    %345 = arith.mulf %344, %343 : vector<8x128xf32>
    %346 = arith.addf %340, %345 : vector<8x128xf32>
    %347 = vector.extract_strided_slice %3 {offsets = [0, 28], sizes = [8, 1], strides = [1, 1]} : vector<8x32xf32> to vector<8x1xf32>
    %c28_148 = arith.constant 28 : index
    %c0_149 = arith.constant 0 : index
    %c0_150 = arith.constant 0 : index
    %348 = vector.load %arg5[%c28_148, %c0_149, %c0_150] : memref<32x8x128xf32, #tpu.memory_space<vmem>>, vector<1x8x128xf32>
    %349 = vector.shape_cast %348 : vector<1x8x128xf32> to vector<8x128xf32>
    %350 = vector.broadcast %347 : vector<8x1xf32> to vector<8x128xf32>
    %351 = arith.mulf %350, %349 : vector<8x128xf32>
    %352 = arith.subf %346, %351 : vector<8x128xf32>
    %353 = vector.extract_strided_slice %1 {offsets = [0, 29], sizes = [8, 1], strides = [1, 1]} : vector<8x32xf32> to vector<8x1xf32>
    %c29 = arith.constant 29 : index
    %c0_151 = arith.constant 0 : index
    %c0_152 = arith.constant 0 : index
    %354 = vector.load %arg4[%c29, %c0_151, %c0_152] : memref<32x8x128xf32, #tpu.memory_space<vmem>>, vector<1x8x128xf32>
    %355 = vector.shape_cast %354 : vector<1x8x128xf32> to vector<8x128xf32>
    %356 = vector.broadcast %353 : vector<8x1xf32> to vector<8x128xf32>
    %357 = arith.mulf %356, %355 : vector<8x128xf32>
    %358 = arith.addf %352, %357 : vector<8x128xf32>
    %359 = vector.extract_strided_slice %3 {offsets = [0, 29], sizes = [8, 1], strides = [1, 1]} : vector<8x32xf32> to vector<8x1xf32>
    %c29_153 = arith.constant 29 : index
    %c0_154 = arith.constant 0 : index
    %c0_155 = arith.constant 0 : index
    %360 = vector.load %arg5[%c29_153, %c0_154, %c0_155] : memref<32x8x128xf32, #tpu.memory_space<vmem>>, vector<1x8x128xf32>
    %361 = vector.shape_cast %360 : vector<1x8x128xf32> to vector<8x128xf32>
    %362 = vector.broadcast %359 : vector<8x1xf32> to vector<8x128xf32>
    %363 = arith.mulf %362, %361 : vector<8x128xf32>
    %364 = arith.subf %358, %363 : vector<8x128xf32>
    %365 = vector.extract_strided_slice %1 {offsets = [0, 30], sizes = [8, 1], strides = [1, 1]} : vector<8x32xf32> to vector<8x1xf32>
    %c30 = arith.constant 30 : index
    %c0_156 = arith.constant 0 : index
    %c0_157 = arith.constant 0 : index
    %366 = vector.load %arg4[%c30, %c0_156, %c0_157] : memref<32x8x128xf32, #tpu.memory_space<vmem>>, vector<1x8x128xf32>
    %367 = vector.shape_cast %366 : vector<1x8x128xf32> to vector<8x128xf32>
    %368 = vector.broadcast %365 : vector<8x1xf32> to vector<8x128xf32>
    %369 = arith.mulf %368, %367 : vector<8x128xf32>
    %370 = arith.addf %364, %369 : vector<8x128xf32>
    %371 = vector.extract_strided_slice %3 {offsets = [0, 30], sizes = [8, 1], strides = [1, 1]} : vector<8x32xf32> to vector<8x1xf32>
    %c30_158 = arith.constant 30 : index
    %c0_159 = arith.constant 0 : index
    %c0_160 = arith.constant 0 : index
    %372 = vector.load %arg5[%c30_158, %c0_159, %c0_160] : memref<32x8x128xf32, #tpu.memory_space<vmem>>, vector<1x8x128xf32>
    %373 = vector.shape_cast %372 : vector<1x8x128xf32> to vector<8x128xf32>
    %374 = vector.broadcast %371 : vector<8x1xf32> to vector<8x128xf32>
    %375 = arith.mulf %374, %373 : vector<8x128xf32>
    %376 = arith.subf %370, %375 : vector<8x128xf32>
    %377 = vector.extract_strided_slice %1 {offsets = [0, 31], sizes = [8, 1], strides = [1, 1]} : vector<8x32xf32> to vector<8x1xf32>
    %c31 = arith.constant 31 : index
    %c0_161 = arith.constant 0 : index
    %c0_162 = arith.constant 0 : index
    %378 = vector.load %arg4[%c31, %c0_161, %c0_162] : memref<32x8x128xf32, #tpu.memory_space<vmem>>, vector<1x8x128xf32>
    %379 = vector.shape_cast %378 : vector<1x8x128xf32> to vector<8x128xf32>
    %380 = vector.broadcast %377 : vector<8x1xf32> to vector<8x128xf32>
    %381 = arith.mulf %380, %379 : vector<8x128xf32>
    %382 = arith.addf %376, %381 : vector<8x128xf32>
    %383 = vector.extract_strided_slice %3 {offsets = [0, 31], sizes = [8, 1], strides = [1, 1]} : vector<8x32xf32> to vector<8x1xf32>
    %c31_163 = arith.constant 31 : index
    %c0_164 = arith.constant 0 : index
    %c0_165 = arith.constant 0 : index
    %384 = vector.load %arg5[%c31_163, %c0_164, %c0_165] : memref<32x8x128xf32, #tpu.memory_space<vmem>>, vector<1x8x128xf32>
    %385 = vector.shape_cast %384 : vector<1x8x128xf32> to vector<8x128xf32>
    %386 = vector.broadcast %383 : vector<8x1xf32> to vector<8x128xf32>
    %387 = arith.mulf %386, %385 : vector<8x128xf32>
    %388 = arith.subf %382, %387 : vector<8x128xf32>
    %c0_166 = arith.constant 0 : index
    %c0_167 = arith.constant 0 : index
    %389 = vector.load %arg6[%c0_166, %c0_167] : memref<8x128xf32, #tpu.memory_space<vmem>>, vector<8x128xf32>
    tpu.vector_store %arg6[%c0_166, %c0_167], %388 {strides = array<i32>} : memref<8x128xf32, #tpu.memory_space<vmem>>, vector<8x128xf32>,
    return
  }
  func.func @transform_0(%arg0: i32, %arg1: i32) -> (i32, i32, i32) {
    %c0_i32 = arith.constant 0 : i32
    %c0_i32_0 = arith.constant 0 : i32
    return %arg1, %arg0, %c0_i32 : i32, i32, i32
  }
  func.func @transform_1(%arg0: i32, %arg1: i32) -> (i32, i32, i32) {
    %c0_i32 = arith.constant 0 : i32
    %c0_i32_0 = arith.constant 0 : i32
    return %arg1, %arg0, %c0_i32 : i32, i32, i32
  }
  func.func @transform_2(%arg0: i32, %arg1: i32) -> (i32, i32, i32) {
    %c0_i32 = arith.constant 0 : i32
    %c0_i32_0 = arith.constant 0 : i32
    %c0_i32_1 = arith.constant 0 : i32
    return %c0_i32, %arg0, %c0_i32_0 : i32, i32, i32
  }
  func.func @transform_3(%arg0: i32, %arg1: i32) -> (i32, i32, i32) {
    %c0_i32 = arith.constant 0 : i32
    %c0_i32_0 = arith.constant 0 : i32
    %c0_i32_1 = arith.constant 0 : i32
    return %c0_i32, %arg0, %c0_i32_0 : i32, i32, i32
  }
  func.func @transform_4(%arg0: i32, %arg1: i32) -> (i32, i32) {
    %c0_i32 = arith.constant 0 : i32
    return %arg0, %arg1 : i32, i32
  }
}

</mosaic_0001>

<llo_original>
// kernel: s4d_kernel_forward.1
$region0: #{s4d_kernel_forward.1}
  #allocation0 [shape = 'u32[]', space=smem, size = 0x4, offset = 0x4, fixed_abs, tag = 'smem constant byte address 0x4 - core index']
  #allocation1 [shape = 'u32[144,128]{1,0:T(1,128)}', space=vmem, size = 0x12000, scoped, tag = 'internal scratch']
  %s0 = inlined_call_operand.vmem [shape: f32[1,8,32], index: 0, kind: input, shape index: {}]
  %s1 = inlined_call_operand.vmem [shape: f32[1,8,32], index: 1, kind: input, shape index: {}]
  %s2 = inlined_call_operand.vmem [shape: f32[32,8,128], index: 2, kind: input, shape index: {}]
  %s3 = inlined_call_operand.vmem [shape: f32[32,8,128], index: 3, kind: input, shape index: {}]
  %s4 = inlined_call_operand.hbm [shape: f32[8,128], index: 4, kind: output, shape index: {}]
  %s5 = sld [smem:[#allocation0]]
  $region26: #{s4d_kernel_forward.1} parent=0
    _
  %s7 = ssub.s32 1, %s5
  %s8 = scalar_select 0, %s7, %s5
  $region1: #{s4d_kernel_forward.1} parent=0
    #allocation2 [shape = 'u8[4096]{0}', space=vmem, size = 0x1000, scoped, tag = 'output window, operand 0, single buffered']
    #allocation3 [shape = 's32[1]{0}', space=sflag, size = 0x4, scoped, tag = 'scoped memory for s4d_kernel_forward.1']
    %9 = vsyncpa [#allocation3], 0
    // Predicated region
    $region2: #{s4d_kernel_forward.1} parent=1 // pred_check
      _
    $region3: #{s4d_kernel_forward.1} parent=1 // pred_check_branch
      %11 = sbr.rel (0) target = $region5
    $region4: #{s4d_kernel_forward.1} parent=1 // pred_region
      _
    $region5: #{s4d_kernel_forward.1} parent=1 // pred_fallthru
      _
    // Predicated region
    $region6: #{s4d_kernel_forward.1} parent=1 // pred_check
      _
    $region7: #{s4d_kernel_forward.1} parent=1 // pred_check_branch
      %13 = sbr.rel (0) target = $region9
    $region8: #{s4d_kernel_forward.1} parent=1 // pred_region
      _
    $region9: #{s4d_kernel_forward.1} parent=1 // pred_fallthru
      _
    // Predicated region
    $region10: #{s4d_kernel_forward.1} parent=1 // pred_check
      _
    $region11: #{s4d_kernel_forward.1} parent=1 // pred_check_branch
      %15 = sbr.rel (0) target = $region13
    $region12: #{s4d_kernel_forward.1} parent=1 // pred_region
      _
    $region13: #{s4d_kernel_forward.1} parent=1 // pred_fallthru
      _
    // Predicated region
    $region14: #{s4d_kernel_forward.1} parent=1 // pred_check
      _
    $region15: #{s4d_kernel_forward.1} parent=1 // pred_check_branch
      %17 = sbr.rel (0) target = $region17
    $region16: #{s4d_kernel_forward.1} parent=1 // pred_region
      _
    $region17: #{s4d_kernel_forward.1} parent=1 // pred_fallthru
      _
    %v18 = vld [vmem:[%s0] sm:$0xff]
    %v19 = vld [vmem:[%s1] sm:$0xff]
    %v20 = vld [vmem:[%s2] sm:$0xff]
    %22 = vset.pattern.permute.xlu0 0
    %23 = vperm.xlu0 %22, %v18
    %v24 = vpop.permute.xlu0 %23
    %v26 = vmul.f32 %v24, %v20
    %v27 = vadd.f32 %v26, 0.0
    %v28 = vld [vmem:[%s3] sm:$0xff]
    %30 = vset.pattern.permute.xlu0 0
    %31 = vperm.xlu0 %30, %v19
    %v32 = vpop.permute.xlu0 %31
    %v34 = vmul.f32 %v32, %v28
    %v35 = vsub.f32 %v27, %v34
    %s36 = scalar_lea.vmem %s2, 8
    %v37 = vld [vmem:[%s36] sm:$0xff]
    %38 = vset.pattern.permute.xlu0 1
    %39 = vperm.xlu0 %38, %v18
    %v40 = vpop.permute.xlu0 %39
    %v42 = vmul.f32 %v40, %v37
    %v43 = vadd.f32 %v35, %v42
    %s44 = scalar_lea.vmem %s3, 8
    %v45 = vld [vmem:[%s44] sm:$0xff]
    %46 = vset.pattern.permute.xlu0 1
    %47 = vperm.xlu0 %46, %v19
    %v48 = vpop.permute.xlu0 %47
    %v50 = vmul.f32 %v48, %v45
    %v51 = vsub.f32 %v43, %v50
    %s52 = scalar_lea.vmem %s2, 16
    %v53 = vld [vmem:[%s52] sm:$0xff]
    %54 = vset.pattern.permute.xlu0 2
    %55 = vperm.xlu0 %54, %v18
    %v56 = vpop.permute.xlu0 %55
    %v58 = vmul.f32 %v56, %v53
    %v59 = vadd.f32 %v51, %v58
    %s60 = scalar_lea.vmem %s3, 16
    %v61 = vld [vmem:[%s60] sm:$0xff]
    %62 = vset.pattern.permute.xlu0 2
    %63 = vperm.xlu0 %62, %v19
    %v64 = vpop.permute.xlu0 %63
    %v66 = vmul.f32 %v64, %v61
    %v67 = vsub.f32 %v59, %v66
    %s68 = scalar_lea.vmem %s2, 24
    %v69 = vld [vmem:[%s68] sm:$0xff]
    %70 = vset.pattern.permute.xlu0 3
    %71 = vperm.xlu0 %70, %v18
    %v72 = vpop.permute.xlu0 %71
    %v74 = vmul.f32 %v72, %v69
    %v75 = vadd.f32 %v67, %v74
    %s76 = scalar_lea.vmem %s3, 24
    %v77 = vld [vmem:[%s76] sm:$0xff]
    %78 = vset.pattern.permute.xlu0 3
    %79 = vperm.xlu0 %78, %v19
    %v80 = vpop.permute.xlu0 %79
    %v82 = vmul.f32 %v80, %v77
    %v83 = vsub.f32 %v75, %v82
    %s84 = scalar_lea.vmem %s2, 32
    %v85 = vld [vmem:[%s84] sm:$0xff]
    %86 = vset.pattern.permute.xlu0 4
    %87 = vperm.xlu0 %86, %v18
    %v88 = vpop.permute.xlu0 %87
    %v90 = vmul.f32 %v88, %v85
    %v91 = vadd.f32 %v83, %v90
    %s92 = scalar_lea.vmem %s3, 32
    %v93 = vld [vmem:[%s92] sm:$0xff]
    %94 = vset.pattern.permute.xlu0 4
    %95 = vperm.xlu0 %94, %v19
    %v96 = vpop.permute.xlu0 %95
    %v98 = vmul.f32 %v96, %v93
    %v99 = vsub.f32 %v91, %v98
    %s100 = scalar_lea.vmem %s2, 40
    %v101 = vld [vmem:[%s100] sm:$0xff]
    %102 = vset.pattern.permute.xlu0 5
    %103 = vperm.xlu0 %102, %v18
    %v104 = vpop.permute.xlu0 %103
    %v106 = vmul.f32 %v104, %v101
    %v107 = vadd.f32 %v99, %v106
    %s108 = scalar_lea.vmem %s3, 40
    %v109 = vld [vmem:[%s108] sm:$0xff]
    %110 = vset.pattern.permute.xlu0 5
    %111 = vperm.xlu0 %110, %v19
    %v112 = vpop.permute.xlu0 %111
    %v114 = vmul.f32 %v112, %v109
    %v115 = vsub.f32 %v107, %v114
    %s116 = scalar_lea.vmem %s2, 48
    %v117 = vld [vmem:[%s116] sm:$0xff]
    %118 = vset.pattern.permute.xlu0 6
    %119 = vperm.xlu0 %118, %v18
    %v120 = vpop.permute.xlu0 %119
    %v122 = vmul.f32 %v120, %v117
    %v123 = vadd.f32 %v115, %v122
    %s124 = scalar_lea.vmem %s3, 48
    %v125 = vld [vmem:[%s124] sm:$0xff]
    %126 = vset.pattern.permute.xlu0 6
    %127 = vperm.xlu0 %126, %v19
    %v128 = vpop.permute.xlu0 %127
    %v130 = vmul.f32 %v128, %v125
    %v131 = vsub.f32 %v123, %v130
    %s132 = scalar_lea.vmem %s2, 56
    %v133 = vld [vmem:[%s132] sm:$0xff]
    %134 = vset.pattern.permute.xlu0 7
    %135 = vperm.xlu0 %134, %v18
    %v136 = vpop.permute.xlu0 %135
    %v138 = vmul.f32 %v136, %v133
    %v139 = vadd.f32 %v131, %v138
    %s140 = scalar_lea.vmem %s3, 56
    %v141 = vld [vmem:[%s140] sm:$0xff]
    %142 = vset.pattern.permute.xlu0 7
    %143 = vperm.xlu0 %142, %v19
    %v144 = vpop.permute.xlu0 %143
    %v146 = vmul.f32 %v144, %v141
    %v147 = vsub.f32 %v139, %v146
    %s148 = scalar_lea.vmem %s2, 64
    %v149 = vld [vmem:[%s148] sm:$0xff]
    %150 = vset.pattern.permute.xlu0 8
    %151 = vperm.xlu0 %150, %v18
    %v152 = vpop.permute.xlu0 %151
    %v154 = vmul.f32 %v152, %v149
    %v155 = vadd.f32 %v147, %v154
    %s156 = scalar_lea.vmem %s3, 64
    %v157 = vld [vmem:[%s156] sm:$0xff]
    %158 = vset.pattern.permute.xlu0 8
    %159 = vperm.xlu0 %158, %v19
    %v160 = vpop.permute.xlu0 %159
    %v162 = vmul.f32 %v160, %v157
    %v163 = vsub.f32 %v155, %v162
    %s164 = scalar_lea.vmem %s2, 72
    %v165 = vld [vmem:[%s164] sm:$0xff]
    %166 = vset.pattern.permute.xlu0 9
    %167 = vperm.xlu0 %166, %v18
    %v168 = vpop.permute.xlu0 %167
    %v170 = vmul.f32 %v168, %v165
    %v171 = vadd.f32 %v163, %v170
    %s172 = scalar_lea.vmem %s3, 72
    %v173 = vld [vmem:[%s172] sm:$0xff]
    %174 = vset.pattern.permute.xlu0 9
    %175 = vperm.xlu0 %174, %v19
    %v176 = vpop.permute.xlu0 %175
    %v178 = vmul.f32 %v176, %v173
    %v179 = vsub.f32 %v171, %v178
    %s180 = scalar_lea.vmem %s2, 80
    %v181 = vld [vmem:[%s180] sm:$0xff]
    %182 = vset.pattern.permute.xlu0 10
    %183 = vperm.xlu0 %182, %v18
    %v184 = vpop.permute.xlu0 %183
    %v186 = vmul.f32 %v184, %v181
    %v187 = vadd.f32 %v179, %v186
    %s188 = scalar_lea.vmem %s3, 80
    %v189 = vld [vmem:[%s188] sm:$0xff]
    %190 = vset.pattern.permute.xlu0 10
    %191 = vperm.xlu0 %190, %v19
    %v192 = vpop.permute.xlu0 %191
    %v194 = vmul.f32 %v192, %v189
    %v195 = vsub.f32 %v187, %v194
    %s196 = scalar_lea.vmem %s2, 88
    %v197 = vld [vmem:[%s196] sm:$0xff]
    %198 = vset.pattern.permute.xlu0 11
    %199 = vperm.xlu0 %198, %v18
    %v200 = vpop.permute.xlu0 %199
    %v202 = vmul.f32 %v200, %v197
    %v203 = vadd.f32 %v195, %v202
    %s204 = scalar_lea.vmem %s3, 88
    %v205 = vld [vmem:[%s204] sm:$0xff]
    %206 = vset.pattern.permute.xlu0 11
    %207 = vperm.xlu0 %206, %v19
    %v208 = vpop.permute.xlu0 %207
    %v210 = vmul.f32 %v208, %v205
    %v211 = vsub.f32 %v203, %v210
    %s212 = scalar_lea.vmem %s2, 96
    %v213 = vld [vmem:[%s212] sm:$0xff]
    %214 = vset.pattern.permute.xlu0 12
    %215 = vperm.xlu0 %214, %v18
    %v216 = vpop.permute.xlu0 %215
    %v218 = vmul.f32 %v216, %v213
    %v219 = vadd.f32 %v211, %v218
    %s220 = scalar_lea.vmem %s3, 96
    %v221 = vld [vmem:[%s220] sm:$0xff]
    %222 = vset.pattern.permute.xlu0 12
    %223 = vperm.xlu0 %222, %v19
    %v224 = vpop.permute.xlu0 %223
    %v226 = vmul.f32 %v224, %v221
    %v227 = vsub.f32 %v219, %v226
    %s228 = scalar_lea.vmem %s2, 104
    %v229 = vld [vmem:[%s228] sm:$0xff]
    %230 = vset.pattern.permute.xlu0 13
    %231 = vperm.xlu0 %230, %v18
    %v232 = vpop.permute.xlu0 %231
    %v234 = vmul.f32 %v232, %v229
    %v235 = vadd.f32 %v227, %v234
    %s236 = scalar_lea.vmem %s3, 104
    %v237 = vld [vmem:[%s236] sm:$0xff]
    %238 = vset.pattern.permute.xlu0 13
    %239 = vperm.xlu0 %238, %v19
    %v240 = vpop.permute.xlu0 %239
    %v242 = vmul.f32 %v240, %v237
    %v243 = vsub.f32 %v235, %v242
    %s244 = scalar_lea.vmem %s2, 112
    %v245 = vld [vmem:[%s244] sm:$0xff]
    %246 = vset.pattern.permute.xlu0 14
    %247 = vperm.xlu0 %246, %v18
    %v248 = vpop.permute.xlu0 %247
    %v250 = vmul.f32 %v248, %v245
    %v251 = vadd.f32 %v243, %v250
    %s252 = scalar_lea.vmem %s3, 112
    %v253 = vld [vmem:[%s252] sm:$0xff]
    %254 = vset.pattern.permute.xlu0 14
    %255 = vperm.xlu0 %254, %v19
    %v256 = vpop.permute.xlu0 %255
    %v258 = vmul.f32 %v256, %v253
    %v259 = vsub.f32 %v251, %v258
    %s260 = scalar_lea.vmem %s2, 120
    %v261 = vld [vmem:[%s260] sm:$0xff]
    %262 = vset.pattern.permute.xlu0 15
    %263 = vperm.xlu0 %262, %v18
    %v264 = vpop.permute.xlu0 %263
    %v266 = vmul.f32 %v264, %v261
    %v267 = vadd.f32 %v259, %v266
    %s268 = scalar_lea.vmem %s3, 120
    %v269 = vld [vmem:[%s268] sm:$0xff]
    %270 = vset.pattern.permute.xlu0 15
    %271 = vperm.xlu0 %270, %v19
    %v272 = vpop.permute.xlu0 %271
    %v274 = vmul.f32 %v272, %v269
    %v275 = vsub.f32 %v267, %v274
    %s276 = scalar_lea.vmem %s2, 128
    %v277 = vld [vmem:[%s276] sm:$0xff]
    %278 = vset.pattern.permute.xlu0 16
    %279 = vperm.xlu0 %278, %v18
    %v280 = vpop.permute.xlu0 %279
    %v282 = vmul.f32 %v280, %v277
    %v283 = vadd.f32 %v275, %v282
    %s284 = scalar_lea.vmem %s3, 128
    %v285 = vld [vmem:[%s284] sm:$0xff]
    %286 = vset.pattern.permute.xlu0 16
    %287 = vperm.xlu0 %286, %v19
    %v288 = vpop.permute.xlu0 %287
    %v290 = vmul.f32 %v288, %v285
    %v291 = vsub.f32 %v283, %v290
    %s292 = scalar_lea.vmem %s2, 136
    %v293 = vld [vmem:[%s292] sm:$0xff]
    %294 = vset.pattern.permute.xlu0 17
    %295 = vperm.xlu0 %294, %v18
    %v296 = vpop.permute.xlu0 %295
    %v298 = vmul.f32 %v296, %v293
    %v299 = vadd.f32 %v291, %v298
    %s300 = scalar_lea.vmem %s3, 136
    %v301 = vld [vmem:[%s300] sm:$0xff]
    %302 = vset.pattern.permute.xlu0 17
    %303 = vperm.xlu0 %302, %v19
    %v304 = vpop.permute.xlu0 %303
    %v306 = vmul.f32 %v304, %v301
    %v307 = vsub.f32 %v299, %v306
    %s308 = scalar_lea.vmem %s2, 144
    %v309 = vld [vmem:[%s308] sm:$0xff]
    %310 = vset.pattern.permute.xlu0 18
    %311 = vperm.xlu0 %310, %v18
    %v312 = vpop.permute.xlu0 %311
    %v314 = vmul.f32 %v312, %v309
    %v315 = vadd.f32 %v307, %v314
    %s316 = scalar_lea.vmem %s3, 144
    %v317 = vld [vmem:[%s316] sm:$0xff]
    %318 = vset.pattern.permute.xlu0 18
    %319 = vperm.xlu0 %318, %v19
    %v320 = vpop.permute.xlu0 %319
    %v322 = vmul.f32 %v320, %v317
    %v323 = vsub.f32 %v315, %v322
    %s324 = scalar_lea.vmem %s2, 152
    %v325 = vld [vmem:[%s324] sm:$0xff]
    %326 = vset.pattern.permute.xlu0 19
    %327 = vperm.xlu0 %326, %v18
    %v328 = vpop.permute.xlu0 %327
    %v330 = vmul.f32 %v328, %v325
    %v331 = vadd.f32 %v323, %v330
    %s332 = scalar_lea.vmem %s3, 152
    %v333 = vld [vmem:[%s332] sm:$0xff]
    %334 = vset.pattern.permute.xlu0 19
    %335 = vperm.xlu0 %334, %v19
    %v336 = vpop.permute.xlu0 %335
    %v338 = vmul.f32 %v336, %v333
    %v339 = vsub.f32 %v331, %v338
    %s340 = scalar_lea.vmem %s2, 160
    %v341 = vld [vmem:[%s340] sm:$0xff]
    %342 = vset.pattern.permute.xlu0 20
    %343 = vperm.xlu0 %342, %v18
    %v344 = vpop.permute.xlu0 %343
    %v346 = vmul.f32 %v344, %v341
    %v347 = vadd.f32 %v339, %v346
    %s348 = scalar_lea.vmem %s3, 160
    %v349 = vld [vmem:[%s348] sm:$0xff]
    %350 = vset.pattern.permute.xlu0 20
    %351 = vperm.xlu0 %350, %v19
    %v352 = vpop.permute.xlu0 %351
    %v354 = vmul.f32 %v352, %v349
    %v355 = vsub.f32 %v347, %v354
    %s356 = scalar_lea.vmem %s2, 168
    %v357 = vld [vmem:[%s356] sm:$0xff]
    %358 = vset.pattern.permute.xlu0 21
    %359 = vperm.xlu0 %358, %v18
    %v360 = vpop.permute.xlu0 %359
    %v362 = vmul.f32 %v360, %v357
    %v363 = vadd.f32 %v355, %v362
    %s364 = scalar_lea.vmem %s3, 168
    %v365 = vld [vmem:[%s364] sm:$0xff]
    %366 = vset.pattern.permute.xlu0 21
    %367 = vperm.xlu0 %366, %v19
    %v368 = vpop.permute.xlu0 %367
    %v370 = vmul.f32 %v368, %v365
    %v371 = vsub.f32 %v363, %v370
    %s372 = scalar_lea.vmem %s2, 176
    %v373 = vld [vmem:[%s372] sm:$0xff]
    %374 = vset.pattern.permute.xlu0 22
    %375 = vperm.xlu0 %374, %v18
    %v376 = vpop.permute.xlu0 %375
    %v378 = vmul.f32 %v376, %v373
    %v379 = vadd.f32 %v371, %v378
    %s380 = scalar_lea.vmem %s3, 176
    %v381 = vld [vmem:[%s380] sm:$0xff]
    %382 = vset.pattern.permute.xlu0 22
    %383 = vperm.xlu0 %382, %v19
    %v384 = vpop.permute.xlu0 %383
    %v386 = vmul.f32 %v384, %v381
    %v387 = vsub.f32 %v379, %v386
    %s388 = scalar_lea.vmem %s2, 184
    %v389 = vld [vmem:[%s388] sm:$0xff]
    %390 = vset.pattern.permute.xlu0 23
    %391 = vperm.xlu0 %390, %v18
    %v392 = vpop.permute.xlu0 %391
    %v394 = vmul.f32 %v392, %v389
    %v395 = vadd.f32 %v387, %v394
    %s396 = scalar_lea.vmem %s3, 184
    %v397 = vld [vmem:[%s396] sm:$0xff]
    %398 = vset.pattern.permute.xlu0 23
    %399 = vperm.xlu0 %398, %v19
    %v400 = vpop.permute.xlu0 %399
    %v402 = vmul.f32 %v400, %v397
    %v403 = vsub.f32 %v395, %v402
    %s404 = scalar_lea.vmem %s2, 192
    %v405 = vld [vmem:[%s404] sm:$0xff]
    %406 = vset.pattern.permute.xlu0 24
    %407 = vperm.xlu0 %406, %v18
    %v408 = vpop.permute.xlu0 %407
    %v410 = vmul.f32 %v408, %v405
    %v411 = vadd.f32 %v403, %v410
    %s412 = scalar_lea.vmem %s3, 192
    %v413 = vld [vmem:[%s412] sm:$0xff]
    %414 = vset.pattern.permute.xlu0 24
    %415 = vperm.xlu0 %414, %v19
    %v416 = vpop.permute.xlu0 %415
    %v418 = vmul.f32 %v416, %v413
    %v419 = vsub.f32 %v411, %v418
    %s420 = scalar_lea.vmem %s2, 200
    %v421 = vld [vmem:[%s420] sm:$0xff]
    %422 = vset.pattern.permute.xlu0 25
    %423 = vperm.xlu0 %422, %v18
    %v424 = vpop.permute.xlu0 %423
    %v426 = vmul.f32 %v424, %v421
    %v427 = vadd.f32 %v419, %v426
    %s428 = scalar_lea.vmem %s3, 200
    %v429 = vld [vmem:[%s428] sm:$0xff]
    %430 = vset.pattern.permute.xlu0 25
    %431 = vperm.xlu0 %430, %v19
    %v432 = vpop.permute.xlu0 %431
    %v434 = vmul.f32 %v432, %v429
    %v435 = vsub.f32 %v427, %v434
    %s436 = scalar_lea.vmem %s2, 208
    %v437 = vld [vmem:[%s436] sm:$0xff]
    %438 = vset.pattern.permute.xlu0 26
    %439 = vperm.xlu0 %438, %v18
    %v440 = vpop.permute.xlu0 %439
    %v442 = vmul.f32 %v440, %v437
    %v443 = vadd.f32 %v435, %v442
    %s444 = scalar_lea.vmem %s3, 208
    %v445 = vld [vmem:[%s444] sm:$0xff]
    %446 = vset.pattern.permute.xlu0 26
    %447 = vperm.xlu0 %446, %v19
    %v448 = vpop.permute.xlu0 %447
    %v450 = vmul.f32 %v448, %v445
    %v451 = vsub.f32 %v443, %v450
    %s452 = scalar_lea.vmem %s2, 216
    %v453 = vld [vmem:[%s452] sm:$0xff]
    %454 = vset.pattern.permute.xlu0 27
    %455 = vperm.xlu0 %454, %v18
    %v456 = vpop.permute.xlu0 %455
    %v458 = vmul.f32 %v456, %v453
    %v459 = vadd.f32 %v451, %v458
    %s460 = scalar_lea.vmem %s3, 216
    %v461 = vld [vmem:[%s460] sm:$0xff]
    %462 = vset.pattern.permute.xlu0 27
    %463 = vperm.xlu0 %462, %v19
    %v464 = vpop.permute.xlu0 %463
    %v466 = vmul.f32 %v464, %v461
    %v467 = vsub.f32 %v459, %v466
    %s468 = scalar_lea.vmem %s2, 224
    %v469 = vld [vmem:[%s468] sm:$0xff]
    %470 = vset.pattern.permute.xlu0 28
    %471 = vperm.xlu0 %470, %v18
    %v472 = vpop.permute.xlu0 %471
    %v474 = vmul.f32 %v472, %v469
    %v475 = vadd.f32 %v467, %v474
    %s476 = scalar_lea.vmem %s3, 224
    %v477 = vld [vmem:[%s476] sm:$0xff]
    %478 = vset.pattern.permute.xlu0 28
    %479 = vperm.xlu0 %478, %v19
    %v480 = vpop.permute.xlu0 %479
    %v482 = vmul.f32 %v480, %v477
    %v483 = vsub.f32 %v475, %v482
    %s484 = scalar_lea.vmem %s2, 232
    %v485 = vld [vmem:[%s484] sm:$0xff]
    %486 = vset.pattern.permute.xlu0 29
    %487 = vperm.xlu0 %486, %v18
    %v488 = vpop.permute.xlu0 %487
    %v490 = vmul.f32 %v488, %v485
    %v491 = vadd.f32 %v483, %v490
    %s492 = scalar_lea.vmem %s3, 232
    %v493 = vld [vmem:[%s492] sm:$0xff]
    %494 = vset.pattern.permute.xlu0 29
    %495 = vperm.xlu0 %494, %v19
    %v496 = vpop.permute.xlu0 %495
    %v498 = vmul.f32 %v496, %v493
    %v499 = vsub.f32 %v491, %v498
    %s500 = scalar_lea.vmem %s2, 240
    %v501 = vld [vmem:[%s500] sm:$0xff]
    %502 = vset.pattern.permute.xlu0 30
    %503 = vperm.xlu0 %502, %v18
    %v504 = vpop.permute.xlu0 %503
    %v506 = vmul.f32 %v504, %v501
    %v507 = vadd.f32 %v499, %v506
    %s508 = scalar_lea.vmem %s3, 240
    %v509 = vld [vmem:[%s508] sm:$0xff]
    %510 = vset.pattern.permute.xlu0 30
    %511 = vperm.xlu0 %510, %v19
    %v512 = vpop.permute.xlu0 %511
    %v514 = vmul.f32 %v512, %v509
    %v515 = vsub.f32 %v507, %v514
    %s516 = scalar_lea.vmem %s2, 248
    %v517 = vld [vmem:[%s516] sm:$0xff]
    %518 = vset.pattern.permute.xlu0 31
    %519 = vperm.xlu0 %518, %v18
    %v520 = vpop.permute.xlu0 %519
    %v522 = vmul.f32 %v520, %v517
    %v523 = vadd.f32 %v515, %v522
    %s524 = scalar_lea.vmem %s3, 248
    %v525 = vld [vmem:[%s524] sm:$0xff]
    %526 = vset.pattern.permute.xlu0 31
    %527 = vperm.xlu0 %526, %v19
    %v528 = vpop.permute.xlu0 %527
    %v530 = vmul.f32 %v528, %v525
    %v531 = vsub.f32 %v523, %v530
    %532 = vst [vmem:[#allocation2] sm:$0xff] %v531
    // Predicated region
    $region18: #{s4d_kernel_forward.1} parent=1 // pred_check
      _
    $region19: #{s4d_kernel_forward.1} parent=1 // pred_check_branch
      %534 = sbr.rel (0) target = $region21
    $region20: #{s4d_kernel_forward.1} parent=1 // pred_region
      %s536 = ssub.s32 128, 128
      %537 = vsyncadd [#allocation3], %s536
      %s539 = sshll.u32 [#allocation2], 4
      %s540 = int_to_ptr.vmem [resolvable:$true] %s539
      %542 = dma.vmem_to_hbm [thread:$0]  %s540, 128, %s4, [#allocation3]
    $region21: #{s4d_kernel_forward.1} parent=1 // pred_fallthru
      _
    // Predicated region
    $region22: #{s4d_kernel_forward.1} parent=1 // pred_check
      _
    $region23: #{s4d_kernel_forward.1} parent=1 // pred_check_branch
      %544 = sbr.rel (0) target = $region25
    $region24: #{s4d_kernel_forward.1} parent=1 // pred_region
      %545 = dma.done [#allocation3], 128
    $region25: #{s4d_kernel_forward.1} parent=1 // pred_fallthru
      _
    %546 = vsyncpa [#allocation3], 1

</llo_original>
